<compile_context>
chip_gen: v6e
topology: v6e:2x2x1
jax: 0.10.0
libtpu: 0.0.40
codegen_flags: <defaults>
</compile_context>

<pallas_src>
import functools

import jax
import jax.numpy as jnp
from jax.experimental import pallas as pl
from jax.experimental.pallas import tpu as pltpu

LANE = 128


def _round_up(x, m):
    return ((x + m - 1) // m) * m


def _pad2d(x, rows, cols):
    return jnp.pad(x, ((0, rows - x.shape[0]), (0, cols - x.shape[1])))


def gcn_layer_kernel(a_ref, h_ref, w_ref, b_ref, o_ref, *, apply_relu,
                     valid_cols):
    """One GCNConv layer row-slab: out = act(A[rows,:] @ (H @ W) + b).

    a_ref : (tm, N)     bf16  row slab of the normalized adjacency
    h_ref : (N, Fin)    f32   full node features (VMEM-resident across steps)
    w_ref : (Fin, Fout) bf16  layer weight
    b_ref : (1, Fout)   f32   layer bias
    o_ref : (tm, Fout)  f32   output row slab
    """
    # Linear transform of all nodes: bf16 MXU inputs, f32 accumulation.
    # NOTE: recomputed per row tile; at the demo sizes the grid has a single
    # step, and for very large N this would be hoisted into its own tiled
    # matmul pallas_call.
    xw = jnp.dot(h_ref[...].astype(jnp.bfloat16), w_ref[...],
                 preferred_element_type=jnp.float32)

    # Neighborhood aggregation for this row slab + bias (f32 epilogue).
    h = jnp.dot(a_ref[...], xw.astype(jnp.bfloat16),
                preferred_element_type=jnp.float32) + b_ref[...]

    if apply_relu:
        h = jnp.maximum(h, 0.0)
    else:
        # Final layer: log_softmax over the feature axis, masking the
        # lane-padding columns so they do not contribute to the normalizer.
        col = jax.lax.broadcasted_iota(jnp.int32, h.shape, dimension=1)
        valid = col < valid_cols
        hm = jnp.where(valid, h, jnp.float32(-1e30))
        m = jnp.max(hm, axis=1, keepdims=True)
        z = hm - m
        denom = jnp.sum(jnp.where(valid, jnp.exp(z), 0.0), axis=1,
                        keepdims=True)
        h = z - jnp.log(denom)

    o_ref[...] = h.astype(o_ref.dtype)


def _gcn_layer(a_bf16, h, w_bf16, b, *, apply_relu, valid_cols, tm):
    n_pad = a_bf16.shape[0]
    fin = h.shape[1]
    fout = w_bf16.shape[1]
    kernel = functools.partial(gcn_layer_kernel, apply_relu=apply_relu,
                               valid_cols=valid_cols)
    return pl.pallas_call(
        kernel,
        out_shape=jax.ShapeDtypeStruct((n_pad, fout), jnp.float32),
        grid_spec=pltpu.PrefetchScalarGridSpec(
            num_scalar_prefetch=0,
            grid=(n_pad // tm,),
            in_specs=[
                pl.BlockSpec((tm, n_pad), lambda i: (i, 0)),    # A row slab
                pl.BlockSpec((n_pad, fin), lambda i: (0, 0)),   # H (resident)
                pl.BlockSpec((fin, fout), lambda i: (0, 0)),    # W (resident)
                pl.BlockSpec((1, fout), lambda i: (0, 0)),      # b (resident)
            ],
            out_specs=pl.BlockSpec((tm, fout), lambda i: (i, 0)),
        ),
        compiler_params=pltpu.CompilerParams(
            dimension_semantics=("parallel",)),
    )(a_bf16, h, w_bf16, b)


def gcn_forward(a_hat, x, params, *, tm=128):
    """3-layer GCN forward (ReLU, eval-mode dropout == identity, log_softmax)."""
    (w1, b1), (w2, b2), (w3, b3) = params
    n = x.shape[0]
    out_dim = w3.shape[1]

    n_pad = _round_up(max(n, LANE), LANE)
    f_in = _round_up(x.shape[1], LANE)
    f_h1 = _round_up(w1.shape[1], LANE)
    f_h2 = _round_up(w2.shape[1], LANE)
    f_out = _round_up(out_dim, LANE)
    tm = min(tm, n_pad)

    # Lane/sublane padding; bf16 at the MXU boundary for A_hat and the weights.
    a_p = _pad2d(a_hat.astype(jnp.float32), n_pad, n_pad).astype(jnp.bfloat16)
    x_p = _pad2d(x.astype(jnp.float32), n_pad, f_in)
    w1p = _pad2d(w1, f_in, f_h1).astype(jnp.bfloat16)
    w2p = _pad2d(w2, f_h1, f_h2).astype(jnp.bfloat16)
    w3p = _pad2d(w3, f_h2, f_out).astype(jnp.bfloat16)
    b1p = _pad2d(b1, 1, f_h1).astype(jnp.float32)
    b2p = _pad2d(b2, 1, f_h2).astype(jnp.float32)
    b3p = _pad2d(b3, 1, f_out).astype(jnp.float32)

    # TODO(synk): F.dropout(training=False) is the identity; no dropout mask.
    h = _gcn_layer(a_p, x_p, w1p, b1p, apply_relu=True, valid_cols=f_h1, tm=tm)
    h = _gcn_layer(a_p, h, w2p, b2p, apply_relu=True, valid_cols=f_h2, tm=tm)
    h = _gcn_layer(a_p, h, w3p, b3p, apply_relu=False, valid_cols=out_dim,
                   tm=tm)
    return h[:n, :out_dim]


def build_normalized_adjacency(edge_index, num_nodes):
    """Dense A_hat = D^-1/2 (A + I) D^-1/2 from a [2, E] edge_index (glue)."""
    src, dst = edge_index[0], edge_index[1]
    adj = jnp.zeros((num_nodes, num_nodes), jnp.float32)
    # message flows src -> dst: A[dst, src] = 1 (duplicates collapse to 1.0)
    adj = adj.at[dst, src].set(1.0)
    # self loops via diagonal .set (never double-counts an existing self edge)
    idx = jnp.arange(num_nodes)
    adj = adj.at[idx, idx].set(1.0)
    deg = jnp.sum(adj, axis=1)
    dinv = jnp.where(deg > 0, 1.0 / jnp.sqrt(deg), 0.0)
    return dinv[:, None] * adj * dinv[None, :]


def init_params(key, input_size, hidden_size, output_size):
    k1, k2, k3 = jax.random.split(key, 3)

    def layer(k, fin, fout):
        scale = 1.0 / jnp.sqrt(jnp.float32(fin))
        w = jax.random.uniform(k, (fin, fout), jnp.float32, -scale, scale)
        b = jnp.zeros((1, fout), jnp.float32)
        return w, b

    return (layer(k1, input_size, hidden_size),
            layer(k2, hidden_size, hidden_size),
            layer(k3, hidden_size, output_size))


def gcn_reference(a_hat, x, params):
    """Plain-JAX f32 reference for the same forward pass."""
    (w1, b1), (w2, b2), (w3, b3) = params
    h = jnp.maximum(a_hat @ (x @ w1) + b1, 0.0)
    h = jnp.maximum(a_hat @ (h @ w2) + b2, 0.0)
    h = a_hat @ (h @ w3) + b3
    return jax.nn.log_softmax(h, axis=1)


if __name__ == "__main__":
    key = jax.random.PRNGKey(0)
    k_feat, k_edge, k_param = jax.random.split(key, 3)

    num_nodes = 16
    input_size = 8
    hidden_size = 32
    output_size = 4

    # node features
    x = jax.random.normal(k_feat, (num_nodes, input_size), jnp.float32)

    # deterministic small undirected graph: random pairs, symmetrized
    src = jax.random.randint(k_edge, (24,), 0, num_nodes)
    dst = jax.random.randint(jax.random.fold_in(k_edge, 1), (24,), 0, num_nodes)
    edge_index = jnp.stack(
        [jnp.concatenate([src, dst]), jnp.concatenate([dst, src])], axis=0)

    a_hat = build_normalized_adjacency(edge_index, num_nodes)
    params = init_params(k_param, input_size, hidden_size, output_size)

    out = gcn_forward(a_hat, x, params)
    jax.block_until_ready(out)

    assert out.shape == (num_nodes, output_size)
    # rows of log_softmax must exp-sum to 1
    row_sums = jnp.sum(jnp.exp(out), axis=1)
    assert bool(jnp.all(jnp.abs(row_sums - 1.0) < 1e-4))
    # matches the f32 reference within bf16-matmul tolerance
    ref = gcn_reference(a_hat, x, params)
    assert bool(jnp.max(jnp.abs(out - ref)) < 1e-1)
    print("KERNEL_OK")
</pallas_src>

<mosaic_0001>
module attributes {stable_mosaic.version = 11 : i64} {
  func.func @gcn_layer_kernel(%arg0: i32, %arg1: memref<128x128xbf16, #tpu.memory_space<vmem>>, %arg2: memref<128x128xf32, #tpu.memory_space<vmem>>, %arg3: memref<128x128xbf16, #tpu.memory_space<vmem>>, %arg4: memref<1x128xf32, #tpu.memory_space<vmem>>, %arg5: memref<128x128xf32, #tpu.memory_space<vmem>>) attributes {dimension_semantics = [#tpu.dimension_semantics<parallel>], iteration_bounds = array<i64: 1>, scalar_prefetch = 0 : i64, scratch_operands = 0 : i64, tpu.core_type = #tpu.core_type<tc>, window_params = [{transform_indices = @transform_0, window_bounds = array<i64: 128, 128>}, {pipeline_mode = #tpu.pipeline_mode<synchronous>, transform_indices = @transform_1, window_bounds = array<i64: 128, 128>}, {pipeline_mode = #tpu.pipeline_mode<synchronous>, transform_indices = @transform_2, window_bounds = array<i64: 128, 128>}, {pipeline_mode = #tpu.pipeline_mode<synchronous>, transform_indices = @transform_3, window_bounds = array<i64: 1, 128>}, {transform_indices = @transform_4, window_bounds = array<i64: 128, 128>}]} {
    %c0 = arith.constant 0 : index
    %c0_0 = arith.constant 0 : index
    %0 = vector.load %arg2[%c0, %c0_0] : memref<128x128xf32, #tpu.memory_space<vmem>>, vector<128x128xf32>
    %1 = arith.truncf %0 : vector<128x128xf32> to vector<128x128xbf16>
    %c0_1 = arith.constant 0 : index
    %c0_2 = arith.constant 0 : index
    %2 = vector.load %arg3[%c0_1, %c0_2] : memref<128x128xbf16, #tpu.memory_space<vmem>>, vector<128x128xbf16>
    %cst = arith.constant dense<0.000000e+00> : vector<128x128xf32>
    %3 = tpu.matmul %1, %2, %cst {dimension_numbers = #tpu.dot_dimension_numbers<[1], [0], [0], [1], [0, 0, 1, 1], [], []>} : vector<128x128xbf16>, vector<128x128xbf16>, vector<128x128xf32> -> vector<128x128xf32>
    %c0_3 = arith.constant 0 : index
    %c0_4 = arith.constant 0 : index
    %4 = vector.load %arg1[%c0_3, %c0_4] : memref<128x128xbf16, #tpu.memory_space<vmem>>, vector<128x128xbf16>
    %5 = arith.truncf %3 : vector<128x128xf32> to vector<128x128xbf16>
    %cst_5 = arith.constant dense<0.000000e+00> : vector<128x128xf32>
    %6 = tpu.matmul %4, %5, %cst_5 {dimension_numbers = #tpu.dot_dimension_numbers<[1], [0], [0], [1], [0, 0, 1, 1], [], []>} : vector<128x128xbf16>, vector<128x128xbf16>, vector<128x128xf32> -> vector<128x128xf32>
    %c0_6 = arith.constant 0 : index
    %c0_7 = arith.constant 0 : index
    %7 = vector.load %arg4[%c0_6, %c0_7] : memref<1x128xf32, #tpu.memory_space<vmem>>, vector<1x128xf32>
    %8 = vector.broadcast %7 : vector<1x128xf32> to vector<128x128xf32>
    %9 = arith.addf %6, %8 : vector<128x128xf32>
    %cst_8 = arith.constant 0.000000e+00 : f32
    %10 = vector.broadcast %cst_8 : f32 to vector<128x128xf32>
    %11 = arith.maximumf %9, %10 : vector<128x128xf32>
    %c0_9 = arith.constant 0 : index
    %c0_10 = arith.constant 0 : index
    %12 = vector.load %arg5[%c0_9, %c0_10] : memref<128x128xf32, #tpu.memory_space<vmem>>, vector<128x128xf32>
    tpu.vector_store %arg5[%c0_9, %c0_10], %11 {strides = array<i32>} : memref<128x128xf32, #tpu.memory_space<vmem>>, vector<128x128xf32>,
    return
  }
  func.func @transform_0(%arg0: i32) -> (i32, i32) {
    %c0_i32 = arith.constant 0 : i32
    %c0_i32_0 = arith.constant 0 : i32
    return %arg0, %c0_i32 : i32, i32
  }
  func.func @transform_1(%arg0: i32) -> (i32, i32) {
    %c0_i32 = arith.constant 0 : i32
    %c0_i32_0 = arith.constant 0 : i32
    %c0_i32_1 = arith.constant 0 : i32
    return %c0_i32, %c0_i32_0 : i32, i32
  }
  func.func @transform_2(%arg0: i32) -> (i32, i32) {
    %c0_i32 = arith.constant 0 : i32
    %c0_i32_0 = arith.constant 0 : i32
    %c0_i32_1 = arith.constant 0 : i32
    return %c0_i32, %c0_i32_0 : i32, i32
  }
  func.func @transform_3(%arg0: i32) -> (i32, i32) {
    %c0_i32 = arith.constant 0 : i32
    %c0_i32_0 = arith.constant 0 : i32
    %c0_i32_1 = arith.constant 0 : i32
    return %c0_i32, %c0_i32_0 : i32, i32
  }
  func.func @transform_4(%arg0: i32) -> (i32, i32) {
    %c0_i32 = arith.constant 0 : i32
    %c0_i32_0 = arith.constant 0 : i32
    return %arg0, %c0_i32 : i32, i32
  }
}

</mosaic_0001>

<llo_original>
// kernel: tpu_custom_call.1
$region0: #{tpu_custom_call.1}
  #allocation0 [shape = 'u32[]', space=smem, size = 0x4, offset = 0x4, fixed_abs, tag = 'smem constant byte address 0x4 - core index']
  #allocation1 [shape = 'u32[144,128]{1,0:T(1,128)}', space=vmem, size = 0x12000, scoped, tag = 'internal scratch']
  %s0 = inlined_call_operand.hbm [shape: bf16[128,128], index: 0, kind: input, shape index: {}]
  %s1 = inlined_call_operand.hbm [shape: f32[128,128], index: 1, kind: input, shape index: {}]
  %s2 = inlined_call_operand.hbm [shape: bf16[128,128], index: 2, kind: input, shape index: {}]
  %s3 = inlined_call_operand.vmem [shape: f32[1,128], index: 3, kind: input, shape index: {}]
  %s4 = inlined_call_operand.hbm [shape: f32[128,128], index: 4, kind: output, shape index: {}]
  %s5 = sld [smem:[#allocation0]]
  $region38: #{tpu_custom_call.1} parent=0
    _
  %s7 = ssub.s32 1, %s5
  %s8 = scalar_select 0, %s7, %s5
  $region1: #{tpu_custom_call.1} parent=0
    #allocation2 [shape = 'u8[32768]{0}', space=vmem, size = 0x8000, scoped, tag = 'input window, operand 0, single buffered']
    #allocation3 [shape = 's32[1]{0}', space=sflag, size = 0x4, scoped, tag = 'scoped memory for tpu_custom_call.1']
    #allocation4 [shape = 's32[1]{0}', space=sflag, size = 0x4, scoped, tag = 'scoped memory for tpu_custom_call.1']
    #allocation5 [shape = 'u8[65536]{0}', space=vmem, size = 0x10000, scoped, tag = 'input window, operand 1, single buffered']
    #allocation6 [shape = 's32[1]{0}', space=sflag, size = 0x4, scoped, tag = 'scoped memory for tpu_custom_call.1']
    #allocation7 [shape = 'u8[32768]{0}', space=vmem, size = 0x8000, scoped, tag = 'input window, operand 2, single buffered']
    #allocation8 [shape = 'u8[65536]{0}', space=vmem, size = 0x10000, scoped, tag = 'output window, operand 0, single buffered']
    %9 = vsyncpa [#allocation3], 0
    %10 = vsyncpa [#allocation6], 0
    %11 = vsyncpa [#allocation4], 0
    // Predicated region
    $region2: #{tpu_custom_call.1} parent=1 // pred_check
      _
    $region3: #{tpu_custom_call.1} parent=1 // pred_check_branch
      %13 = sbr.rel (0) target = $region5
    $region4: #{tpu_custom_call.1} parent=1 // pred_region
      %s15 = ssub.s32 1024, 1024
      %16 = vsyncadd [#allocation3], %s15
      %s17 = sshll.u32 [#allocation2], 4
      %s18 = int_to_ptr.vmem [resolvable:$true] %s17
      %23 = dma.hbm_to_vmem [thread:$0]  %s0, 1024, %s18, [#allocation3], 64, 64, 4
    $region5: #{tpu_custom_call.1} parent=1 // pred_fallthru
      _
    // Predicated region
    $region6: #{tpu_custom_call.1} parent=1 // pred_check
      _
    $region7: #{tpu_custom_call.1} parent=1 // pred_check_branch
      %25 = sbr.rel (0) target = $region9
    $region8: #{tpu_custom_call.1} parent=1 // pred_region
      %s27 = ssub.s32 2048, 2048
      %28 = vsyncadd [#allocation6], %s27
      %s29 = sshll.u32 [#allocation5], 4
      %s30 = int_to_ptr.vmem [resolvable:$true] %s29
      %35 = dma.hbm_to_vmem [thread:$0]  %s1, 2048, %s30, [#allocation6], 128, 128, 8
    $region9: #{tpu_custom_call.1} parent=1 // pred_fallthru
      _
    // Predicated region
    $region10: #{tpu_custom_call.1} parent=1 // pred_check
      _
    $region11: #{tpu_custom_call.1} parent=1 // pred_check_branch
      %37 = sbr.rel (0) target = $region13
    $region12: #{tpu_custom_call.1} parent=1 // pred_region
      %s39 = ssub.s32 1024, 1024
      %40 = vsyncadd [#allocation6], %s39
      %s41 = sshll.u32 [#allocation7], 4
      %s42 = int_to_ptr.vmem [resolvable:$true] %s41
      %47 = dma.hbm_to_vmem [thread:$0]  %s2, 1024, %s42, [#allocation6], 64, 64, 4
    $region13: #{tpu_custom_call.1} parent=1 // pred_fallthru
      _
    // Predicated region
    $region14: #{tpu_custom_call.1} parent=1 // pred_check
      _
    $region15: #{tpu_custom_call.1} parent=1 // pred_check_branch
      %49 = sbr.rel (0) target = $region17
    $region16: #{tpu_custom_call.1} parent=1 // pred_region
      _
    $region17: #{tpu_custom_call.1} parent=1 // pred_fallthru
      _
    // Predicated region
    $region18: #{tpu_custom_call.1} parent=1 // pred_check
      _
    $region19: #{tpu_custom_call.1} parent=1 // pred_check_branch
      %51 = sbr.rel (0) target = $region21
    $region20: #{tpu_custom_call.1} parent=1 // pred_region
      %52 = dma.done [#allocation3], 1024
    $region21: #{tpu_custom_call.1} parent=1 // pred_fallthru
      _
    // Predicated region
    $region22: #{tpu_custom_call.1} parent=1 // pred_check
      _
    $region23: #{tpu_custom_call.1} parent=1 // pred_check_branch
      %54 = sbr.rel (0) target = $region25
    $region24: #{tpu_custom_call.1} parent=1 // pred_region
      %55 = dma.done [#allocation6], 2048
    $region25: #{tpu_custom_call.1} parent=1 // pred_fallthru
      _
    // Predicated region
    $region26: #{tpu_custom_call.1} parent=1 // pred_check
      _
    $region27: #{tpu_custom_call.1} parent=1 // pred_check_branch
      %57 = sbr.rel (0) target = $region29
    $region28: #{tpu_custom_call.1} parent=1 // pred_region
      %58 = dma.done [#allocation6], 1024
    $region29: #{tpu_custom_call.1} parent=1 // pred_fallthru
      _
    %v60 = vld [vmem:[#allocation5] sm:$0xff]
    %v61 = vld [vmem:[#allocation5 + $0x8] sm:$0xff]
    %v62 = vld [vmem:[#allocation5 + $0x10] sm:$0xff]
    %v63 = vld [vmem:[#allocation5 + $0x18] sm:$0xff]
    %v64 = vld [vmem:[#allocation5 + $0x20] sm:$0xff]
    %v65 = vld [vmem:[#allocation5 + $0x28] sm:$0xff]
    %v66 = vld [vmem:[#allocation5 + $0x30] sm:$0xff]
    %v67 = vld [vmem:[#allocation5 + $0x38] sm:$0xff]
    %v68 = vld [vmem:[#allocation5 + $0x40] sm:$0xff]
    %v69 = vld [vmem:[#allocation5 + $0x48] sm:$0xff]
    %v70 = vld [vmem:[#allocation5 + $0x50] sm:$0xff]
    %v71 = vld [vmem:[#allocation5 + $0x58] sm:$0xff]
    %v72 = vld [vmem:[#allocation5 + $0x60] sm:$0xff]
    %v73 = vld [vmem:[#allocation5 + $0x68] sm:$0xff]
    %v74 = vld [vmem:[#allocation5 + $0x70] sm:$0xff]
    %v75 = vld [vmem:[#allocation5 + $0x78] sm:$0xff]
    %v76 = vpack.c.bf16 %v61, %v60
    %v77 = vpack.c.bf16 %v63, %v62
    %v78 = vpack.c.bf16 %v65, %v64
    %v79 = vpack.c.bf16 %v67, %v66
    %v80 = vpack.c.bf16 %v69, %v68
    %v81 = vpack.c.bf16 %v71, %v70
    %v82 = vpack.c.bf16 %v73, %v72
    %v83 = vpack.c.bf16 %v75, %v74
    %v84 = vld [vmem:[#allocation7] sm:$0xf]
    %v85 = vld [vmem:[#allocation7 + $0x4] sm:$0xf]
    %v86 = vld [vmem:[#allocation7 + $0x8] sm:$0xf]
    %v87 = vld [vmem:[#allocation7 + $0xc] sm:$0xf]
    %v88 = vld [vmem:[#allocation7 + $0x10] sm:$0xf]
    %v89 = vld [vmem:[#allocation7 + $0x14] sm:$0xf]
    %v90 = vld [vmem:[#allocation7 + $0x18] sm:$0xf]
    %v91 = vld [vmem:[#allocation7 + $0x1c] sm:$0xf]
    %v92 = vld [vmem:[#allocation7 + $0x20] sm:$0xf]
    %v93 = vld [vmem:[#allocation7 + $0x24] sm:$0xf]
    %v94 = vld [vmem:[#allocation7 + $0x28] sm:$0xf]
    %v95 = vld [vmem:[#allocation7 + $0x2c] sm:$0xf]
    %v96 = vld [vmem:[#allocation7 + $0x30] sm:$0xf]
    %v97 = vld [vmem:[#allocation7 + $0x34] sm:$0xf]
    %v98 = vld [vmem:[#allocation7 + $0x38] sm:$0xf]
    %v99 = vld [vmem:[#allocation7 + $0x3c] sm:$0xf]
    %v116 = vunpack.c.l.b16 %v84
    %v117 = vunpack.c.l.b16 %v85
    %v118 = vunpack.c.l.b16 %v86
    %v119 = vunpack.c.l.b16 %v87
    %v120 = vunpack.c.l.b16 %v88
    %v121 = vunpack.c.l.b16 %v89
    %v122 = vunpack.c.l.b16 %v90
    %v123 = vunpack.c.l.b16 %v91
    %v124 = vunpack.c.l.b16 %v92
    %v125 = vunpack.c.l.b16 %v93
    %v126 = vunpack.c.l.b16 %v94
    %v127 = vunpack.c.l.b16 %v95
    %v128 = vunpack.c.l.b16 %v96
    %v129 = vunpack.c.l.b16 %v97
    %v130 = vunpack.c.l.b16 %v98
    %v131 = vunpack.c.l.b16 %v99
    %v132 = vpack.c.b16 %v117, %v116
    %v133 = vpack.c.b16 %v119, %v118
    %v134 = vpack.c.b16 %v121, %v120
    %v135 = vpack.c.b16 %v123, %v122
    %v136 = vpack.c.b16 %v125, %v124
    %v137 = vpack.c.b16 %v127, %v126
    %v138 = vpack.c.b16 %v129, %v128
    %v139 = vpack.c.b16 %v131, %v130
    %148 = vmatprep.subr.bf16.mxu0 0
    %149 = vmatpush1.bf16.msra.mxu0 %v139
    %150 = vmatprep.subr.bf16.mxu0 0
    %151 = vmatpush1.bf16.msra.mxu0 %v138
    %152 = vmatprep.subr.bf16.mxu0 0
    %153 = vmatpush1.bf16.msra.mxu0 %v137
    %154 = vmatprep.subr.bf16.mxu0 0
    %155 = vmatpush1.bf16.msra.mxu0 %v136
    %156 = vmatprep.subr.bf16.mxu0 0
    %157 = vmatpush1.bf16.msra.mxu0 %v135
    %158 = vmatprep.subr.bf16.mxu0 0
    %159 = vmatpush1.bf16.msra.mxu0 %v134
    %160 = vmatprep.subr.bf16.mxu0 0
    %161 = vmatpush1.bf16.msra.mxu0 %v133
    %162 = vmatprep.subr.bf16.mxu0 0
    %163 = vmatpush1.bf16.msra.mxu0 %v132
    %164 = vmatprep.subr.bf16.mxu0 0
    %165 = vmatpush2.bf16.msra.mxu0 0
    %166 = vmatprep.subr.bf16.mxu0 0
    %167 = vmatpush2.bf16.msra.mxu0 0
    %168 = vmatprep.subr.bf16.mxu0 0
    %169 = vmatpush2.bf16.msra.mxu0 0
    %170 = vmatprep.subr.bf16.mxu0 0
    %171 = vmatpush2.bf16.msra.mxu0 0
    %172 = vmatprep.subr.bf16.mxu0 0
    %173 = vmatpush2.bf16.msra.mxu0 0
    %174 = vmatprep.subr.bf16.mxu0 0
    %175 = vmatpush2.bf16.msra.mxu0 0
    %176 = vmatprep.subr.bf16.mxu0 0
    %177 = vmatpush2.bf16.msra.mxu0 0
    %178 = vmatprep.subr.bf16.mxu0 0
    %179 = vmatpush2.bf16.msra.mxu0 0
    %180 = vmatprep.mubr.bf16.mxu0 0
    %181 = vmatmul.mubr.bf16.gmra.mxu0 %v76
    %v182 = vpop.f32.mrf.mxu0
    %v183 = vadd.f32 0.0, %v182
    %v184 = vpop.f32.mrf.mxu0
    %v185 = vpop.f32.mrf.mxu0
    %v186 = vadd.f32 0.0, %v185
    %v187 = vpop.f32.mrf.mxu0
    %188 = vmatprep.mubr.bf16.mxu0 0
    %189 = vmatmul.mubr.bf16.gmra.mxu0 %v77
    %v190 = vpop.f32.mrf.mxu0
    %v191 = vadd.f32 0.0, %v190
    %v192 = vpop.f32.mrf.mxu0
    %v193 = vpop.f32.mrf.mxu0
    %v194 = vadd.f32 0.0, %v193
    %v195 = vpop.f32.mrf.mxu0
    %196 = vmatprep.mubr.bf16.mxu0 0
    %197 = vmatmul.mubr.bf16.gmra.mxu0 %v78
    %v198 = vpop.f32.mrf.mxu0
    %v199 = vadd.f32 0.0, %v198
    %v200 = vpop.f32.mrf.mxu0
    %v201 = vpop.f32.mrf.mxu0
    %v202 = vadd.f32 0.0, %v201
    %v203 = vpop.f32.mrf.mxu0
    %204 = vmatprep.mubr.bf16.mxu0 0
    %205 = vmatmul.mubr.bf16.gmra.mxu0 %v79
    %v206 = vpop.f32.mrf.mxu0
    %v207 = vadd.f32 0.0, %v206
    %v208 = vpop.f32.mrf.mxu0
    %v209 = vpop.f32.mrf.mxu0
    %v210 = vadd.f32 0.0, %v209
    %v211 = vpop.f32.mrf.mxu0
    %212 = vmatprep.mubr.bf16.mxu0 0
    %213 = vmatmul.mubr.bf16.gmra.mxu0 %v80
    %v214 = vpop.f32.mrf.mxu0
    %v215 = vadd.f32 0.0, %v214
    %v216 = vpop.f32.mrf.mxu0
    %v217 = vpop.f32.mrf.mxu0
    %v218 = vadd.f32 0.0, %v217
    %v219 = vpop.f32.mrf.mxu0
    %220 = vmatprep.mubr.bf16.mxu0 0
    %221 = vmatmul.mubr.bf16.gmra.mxu0 %v81
    %v222 = vpop.f32.mrf.mxu0
    %v223 = vadd.f32 0.0, %v222
    %v224 = vpop.f32.mrf.mxu0
    %v225 = vpop.f32.mrf.mxu0
    %v226 = vadd.f32 0.0, %v225
    %v227 = vpop.f32.mrf.mxu0
    %228 = vmatprep.mubr.bf16.mxu0 0
    %229 = vmatmul.mubr.bf16.gmra.mxu0 %v82
    %v230 = vpop.f32.mrf.mxu0
    %v231 = vadd.f32 0.0, %v230
    %v232 = vpop.f32.mrf.mxu0
    %v233 = vpop.f32.mrf.mxu0
    %v234 = vadd.f32 0.0, %v233
    %v235 = vpop.f32.mrf.mxu0
    %236 = vmatprep.mubr.bf16.mxu0 0
    %237 = vmatmul.mubr.bf16.gmra.mxu0 %v83
    %v238 = vpop.f32.mrf.mxu0
    %v239 = vadd.f32 0.0, %v238
    %v240 = vpop.f32.mrf.mxu0
    %v241 = vpop.f32.mrf.mxu0
    %v242 = vadd.f32 0.0, %v241
    %v243 = vpop.f32.mrf.mxu0
    %244 = vdwg.mxu0
    %v245 = vld [vmem:[#allocation2] sm:$0xf]
    %v246 = vld [vmem:[#allocation2 + $0x4] sm:$0xf]
    %v247 = vld [vmem:[#allocation2 + $0x8] sm:$0xf]
    %v248 = vld [vmem:[#allocation2 + $0xc] sm:$0xf]
    %v249 = vld [vmem:[#allocation2 + $0x10] sm:$0xf]
    %v250 = vld [vmem:[#allocation2 + $0x14] sm:$0xf]
    %v251 = vld [vmem:[#allocation2 + $0x18] sm:$0xf]
    %v252 = vld [vmem:[#allocation2 + $0x1c] sm:$0xf]
    %v253 = vld [vmem:[#allocation2 + $0x20] sm:$0xf]
    %v254 = vld [vmem:[#allocation2 + $0x24] sm:$0xf]
    %v255 = vld [vmem:[#allocation2 + $0x28] sm:$0xf]
    %v256 = vld [vmem:[#allocation2 + $0x2c] sm:$0xf]
    %v257 = vld [vmem:[#allocation2 + $0x30] sm:$0xf]
    %v258 = vld [vmem:[#allocation2 + $0x34] sm:$0xf]
    %v259 = vld [vmem:[#allocation2 + $0x38] sm:$0xf]
    %v260 = vld [vmem:[#allocation2 + $0x3c] sm:$0xf]
    %v261 = vpack.c.bf16 %v186, %v183
    %v262 = vpack.c.bf16 %v194, %v191
    %v263 = vpack.c.bf16 %v202, %v199
    %v264 = vpack.c.bf16 %v210, %v207
    %v265 = vpack.c.bf16 %v218, %v215
    %v266 = vpack.c.bf16 %v226, %v223
    %v267 = vpack.c.bf16 %v234, %v231
    %v268 = vpack.c.bf16 %v242, %v239
    %v269 = vld [vmem:[%s3] sm:$0x1]
    %v271 = vlaneseq
    %v272 = vshrl.u32 %v271, 7
    %v273 = vsub.s32 0, %v272
    %v274 = vrot.slane %v269, %v273
    %v292 = vunpack.c.l.b16 %v245
    %v293 = vunpack.c.l.b16 %v246
    %v294 = vunpack.c.l.b16 %v247
    %v295 = vunpack.c.l.b16 %v248
    %v296 = vunpack.c.l.b16 %v249
    %v297 = vunpack.c.l.b16 %v250
    %v298 = vunpack.c.l.b16 %v251
    %v299 = vunpack.c.l.b16 %v252
    %v300 = vunpack.c.l.b16 %v253
    %v301 = vunpack.c.l.b16 %v254
    %v302 = vunpack.c.l.b16 %v255
    %v303 = vunpack.c.l.b16 %v256
    %v304 = vunpack.c.l.b16 %v257
    %v305 = vunpack.c.l.b16 %v258
    %v306 = vunpack.c.l.b16 %v259
    %v307 = vunpack.c.l.b16 %v260
    %v308 = vpack.c.b16 %v293, %v292
    %v309 = vpack.c.b16 %v295, %v294
    %v310 = vpack.c.b16 %v297, %v296
    %v311 = vpack.c.b16 %v299, %v298
    %v312 = vpack.c.b16 %v301, %v300
    %v313 = vpack.c.b16 %v303, %v302
    %v314 = vpack.c.b16 %v305, %v304
    %v315 = vpack.c.b16 %v307, %v306
    %324 = vmatprep.subr.bf16.mxu0 0
    %325 = vmatpush1.bf16.msra.mxu0 %v268
    %326 = vmatprep.subr.bf16.mxu0 0
    %327 = vmatpush1.bf16.msra.mxu0 %v267
    %328 = vmatprep.subr.bf16.mxu0 0
    %329 = vmatpush1.bf16.msra.mxu0 %v266
    %330 = vmatprep.subr.bf16.mxu0 0
    %331 = vmatpush1.bf16.msra.mxu0 %v265
    %332 = vmatprep.subr.bf16.mxu0 0
    %333 = vmatpush1.bf16.msra.mxu0 %v264
    %334 = vmatprep.subr.bf16.mxu0 0
    %335 = vmatpush1.bf16.msra.mxu0 %v263
    %336 = vmatprep.subr.bf16.mxu0 0
    %337 = vmatpush1.bf16.msra.mxu0 %v262
    %338 = vmatprep.subr.bf16.mxu0 0
    %339 = vmatpush1.bf16.msra.mxu0 %v261
    %340 = vmatprep.subr.bf16.mxu0 0
    %341 = vmatpush2.bf16.msra.mxu0 0
    %342 = vmatprep.subr.bf16.mxu0 0
    %343 = vmatpush2.bf16.msra.mxu0 0
    %344 = vmatprep.subr.bf16.mxu0 0
    %345 = vmatpush2.bf16.msra.mxu0 0
    %346 = vmatprep.subr.bf16.mxu0 0
    %347 = vmatpush2.bf16.msra.mxu0 0
    %348 = vmatprep.subr.bf16.mxu0 0
    %349 = vmatpush2.bf16.msra.mxu0 0
    %350 = vmatprep.subr.bf16.mxu0 0
    %351 = vmatpush2.bf16.msra.mxu0 0
    %352 = vmatprep.subr.bf16.mxu0 0
    %353 = vmatpush2.bf16.msra.mxu0 0
    %354 = vmatprep.subr.bf16.mxu0 0
    %355 = vmatpush2.bf16.msra.mxu0 0
    %356 = vmatprep.mubr.bf16.mxu0 0
    %357 = vmatmul.mubr.bf16.gmra.mxu0 %v308
    %v358 = vpop.f32.mrf.mxu0
    %v359 = vadd.f32 %v274, %v358
    %v360 = vpop.f32.mrf.mxu0
    %v361 = vpop.f32.mrf.mxu0
    %v362 = vadd.f32 %v274, %v361
    %v363 = vpop.f32.mrf.mxu0
    %364 = vmatprep.mubr.bf16.mxu0 0
    %365 = vmatmul.mubr.bf16.gmra.mxu0 %v309
    %v366 = vpop.f32.mrf.mxu0
    %v367 = vadd.f32 %v274, %v366
    %v368 = vpop.f32.mrf.mxu0
    %v369 = vpop.f32.mrf.mxu0
    %v370 = vadd.f32 %v274, %v369
    %v371 = vpop.f32.mrf.mxu0
    %372 = vmatprep.mubr.bf16.mxu0 0
    %373 = vmatmul.mubr.bf16.gmra.mxu0 %v310
    %v374 = vpop.f32.mrf.mxu0
    %v375 = vadd.f32 %v274, %v374
    %v376 = vpop.f32.mrf.mxu0
    %v377 = vpop.f32.mrf.mxu0
    %v378 = vadd.f32 %v274, %v377
    %v379 = vpop.f32.mrf.mxu0
    %380 = vmatprep.mubr.bf16.mxu0 0
    %381 = vmatmul.mubr.bf16.gmra.mxu0 %v311
    %v382 = vpop.f32.mrf.mxu0
    %v383 = vadd.f32 %v274, %v382
    %v384 = vpop.f32.mrf.mxu0
    %v385 = vpop.f32.mrf.mxu0
    %v386 = vadd.f32 %v274, %v385
    %v387 = vpop.f32.mrf.mxu0
    %388 = vmatprep.mubr.bf16.mxu0 0
    %389 = vmatmul.mubr.bf16.gmra.mxu0 %v312
    %v390 = vpop.f32.mrf.mxu0
    %v391 = vadd.f32 %v274, %v390
    %v392 = vpop.f32.mrf.mxu0
    %v393 = vpop.f32.mrf.mxu0
    %v394 = vadd.f32 %v274, %v393
    %v395 = vpop.f32.mrf.mxu0
    %396 = vmatprep.mubr.bf16.mxu0 0
    %397 = vmatmul.mubr.bf16.gmra.mxu0 %v313
    %v398 = vpop.f32.mrf.mxu0
    %v399 = vadd.f32 %v274, %v398
    %v400 = vpop.f32.mrf.mxu0
    %v401 = vpop.f32.mrf.mxu0
    %v402 = vadd.f32 %v274, %v401
    %v403 = vpop.f32.mrf.mxu0
    %404 = vmatprep.mubr.bf16.mxu0 0
    %405 = vmatmul.mubr.bf16.gmra.mxu0 %v314
    %v406 = vpop.f32.mrf.mxu0
    %v407 = vadd.f32 %v274, %v406
    %v408 = vpop.f32.mrf.mxu0
    %v409 = vpop.f32.mrf.mxu0
    %v410 = vadd.f32 %v274, %v409
    %v411 = vpop.f32.mrf.mxu0
    %412 = vmatprep.mubr.bf16.mxu0 0
    %413 = vmatmul.mubr.bf16.gmra.mxu0 %v315
    %v414 = vpop.f32.mrf.mxu0
    %v415 = vadd.f32 %v274, %v414
    %v416 = vpop.f32.mrf.mxu0
    %v417 = vpop.f32.mrf.mxu0
    %v418 = vadd.f32 %v274, %v417
    %v419 = vpop.f32.mrf.mxu0
    %420 = vdwg.mxu0
    %v421 = vmax.f32 %v359, 0.0
    %v422 = vmax.f32 %v362, 0.0
    %v423 = vmax.f32 %v367, 0.0
    %v424 = vmax.f32 %v370, 0.0
    %v425 = vmax.f32 %v375, 0.0
    %v426 = vmax.f32 %v378, 0.0
    %v427 = vmax.f32 %v383, 0.0
    %v428 = vmax.f32 %v386, 0.0
    %v429 = vmax.f32 %v391, 0.0
    %v430 = vmax.f32 %v394, 0.0
    %v431 = vmax.f32 %v399, 0.0
    %v432 = vmax.f32 %v402, 0.0
    %v433 = vmax.f32 %v407, 0.0
    %v434 = vmax.f32 %v410, 0.0
    %v435 = vmax.f32 %v415, 0.0
    %v436 = vmax.f32 %v418, 0.0
    %437 = vst [vmem:[#allocation8] sm:$0xff] %v421
    %438 = vst [vmem:[#allocation8 + $0x8] sm:$0xff] %v422
    %439 = vst [vmem:[#allocation8 + $0x10] sm:$0xff] %v423
    %440 = vst [vmem:[#allocation8 + $0x18] sm:$0xff] %v424
    %441 = vst [vmem:[#allocation8 + $0x20] sm:$0xff] %v425
    %442 = vst [vmem:[#allocation8 + $0x28] sm:$0xff] %v426
    %443 = vst [vmem:[#allocation8 + $0x30] sm:$0xff] %v427
    %444 = vst [vmem:[#allocation8 + $0x38] sm:$0xff] %v428
    %445 = vst [vmem:[#allocation8 + $0x40] sm:$0xff] %v429
    %446 = vst [vmem:[#allocation8 + $0x48] sm:$0xff] %v430
    %447 = vst [vmem:[#allocation8 + $0x50] sm:$0xff] %v431
    %448 = vst [vmem:[#allocation8 + $0x58] sm:$0xff] %v432
    %449 = vst [vmem:[#allocation8 + $0x60] sm:$0xff] %v433
    %450 = vst [vmem:[#allocation8 + $0x68] sm:$0xff] %v434
    %451 = vst [vmem:[#allocation8 + $0x70] sm:$0xff] %v435
    %452 = vst [vmem:[#allocation8 + $0x78] sm:$0xff] %v436
    // Predicated region
    $region30: #{tpu_custom_call.1} parent=1 // pred_check
      _
    $region31: #{tpu_custom_call.1} parent=1 // pred_check_branch
      %454 = sbr.rel (0) target = $region33
    $region32: #{tpu_custom_call.1} parent=1 // pred_region
      %s456 = ssub.s32 2048, 2048
      %457 = vsyncadd [#allocation4], %s456
      %s458 = sshll.u32 [#allocation8], 4
      %s459 = int_to_ptr.vmem [resolvable:$true] %s458
      %464 = dma.vmem_to_hbm [thread:$0]  %s459, 2048, %s4, [#allocation4], 128, 128, 8
    $region33: #{tpu_custom_call.1} parent=1 // pred_fallthru
      _
    // Predicated region
    $region34: #{tpu_custom_call.1} parent=1 // pred_check
      _
    $region35: #{tpu_custom_call.1} parent=1 // pred_check_branch
      %466 = sbr.rel (0) target = $region37
    $region36: #{tpu_custom_call.1} parent=1 // pred_region
      %467 = dma.done [#allocation4], 2048
    $region37: #{tpu_custom_call.1} parent=1 // pred_fallthru
      _
    %468 = vsyncpa [#allocation3], 1
    %469 = vsyncpa [#allocation6], 1
    %470 = vsyncpa [#allocation4], 1

</llo_original>
